<compile_context>
chip_gen: v7x
topology: tpu7x:2x2x1
jax: 0.10.0
libtpu: 0.0.40
codegen_flags: <defaults>
</compile_context>

<pallas_src>
import math

import jax
import jax.numpy as jnp
from jax.experimental import pallas as pl
from jax.experimental.pallas import tpu as pltpu


def _round_up(x, m):
    return ((x + m - 1) // m) * m


def _vmem_capacity_bytes():
    """Per-TensorCore VMEM capacity (v5e/v6e: 128 MiB, v7x: 64 MiB)."""
    try:
        return int(pltpu.get_tpu_info().vmem_capacity_bytes)
    except Exception:
        return 64 * 1024 * 1024  # conservative default (v7x per-TC)


def _default_fused_tm():
    """Batch-tile for the fused path.  v5e's MXU is 4x128x128: tm=256 buys
    nothing there and only doubles the live f32 accumulator / spill pressure."""
    try:
        kind = jax.devices()[0].device_kind.lower()
    except Exception:
        kind = ""
    if "v5 lite" in kind or "v5e" in kind:
        return 128
    return 256


# ----------------------------------------------------------------------------
# Path 1: whole-MLP fused kernel (weights VMEM-resident, one pallas_call).
# ----------------------------------------------------------------------------
def _make_fused_mlp_kernel(num_layers):
    def kernel(x_ref, *args):
        # args = (w_0, b_0, w_1, b_1, ..., w_{L-1}, b_{L-1}, o_ref)
        o_ref = args[-1]
        h = x_ref[...]
        for l in range(num_layers):
            w = args[2 * l][...]
            b = args[2 * l + 1][...]
            acc = jnp.dot(h, w, preferred_element_type=jnp.float32)  # MXU, f32 acc
            acc = acc + b.astype(jnp.float32)                        # bias in f32
            h = jnp.maximum(acc, 0.0).astype(w.dtype)                # ReLU (VPU)
            # TODO(synk): for very wide layers (>~2048 lanes) split this dot over
            # static N chunks so the live f32 accumulator stays a few hundred KiB.
        o_ref[...] = h.astype(o_ref.dtype)
    return kernel


def _build_fused_call(num_layers, tm, pdims, out_dtype, pB, single_buffer_weights,
                      vmem_limit, flops, bytes_accessed):
    vmem = pltpu.MemorySpace.VMEM
    resident_kwargs = dict(memory_space=vmem)
    if single_buffer_weights:
        # Constant index_map -> the block never changes across the grid, so one
        # buffer suffices; halves the weights' VMEM footprint vs the default 2.
        resident_kwargs["pipeline_mode"] = pl.Buffered(1)

    in_specs = [pl.BlockSpec((tm, pdims[0]), lambda m: (m, 0), memory_space=vmem)]
    for l in range(num_layers):
        in_specs.append(pl.BlockSpec((pdims[l], pdims[l + 1]),
                                     lambda m: (0, 0), **resident_kwargs))
        in_specs.append(pl.BlockSpec((1, pdims[l + 1]),
                                     lambda m: (0, 0), **resident_kwargs))
    out_specs = pl.BlockSpec((tm, pdims[-1]), lambda m: (m, 0), memory_space=vmem)

    return pl.pallas_call(
        _make_fused_mlp_kernel(num_layers),
        out_shape=jax.ShapeDtypeStruct((pB, pdims[-1]), out_dtype),
        grid=(pB // tm,),
        in_specs=in_specs,
        out_specs=out_specs,
        compiler_params=pltpu.CompilerParams(
            dimension_semantics=("parallel",),       # batch axis shards across TCs
            vmem_limit_bytes=vmem_limit),
        cost_estimate=pl.CostEstimate(
            flops=flops, transcendentals=0, bytes_accessed=bytes_accessed),
    )


# ----------------------------------------------------------------------------
# Path 2: per-layer (M, N, K)-tiled kernel for layers too big to keep resident.
# ----------------------------------------------------------------------------
def _linear_relu_tiled_kernel(x_ref, w_ref, b_ref, o_ref, acc_ref):
    k = pl.program_id(2)

    @pl.when(k == 0)
    def _():
        acc_ref[...] = jnp.zeros_like(acc_ref)

    acc_ref[...] += jnp.dot(x_ref[...], w_ref[...], preferred_element_type=jnp.float32)

    @pl.when(k == pl.num_programs(2) - 1)
    def _():
        acc = acc_ref[...] + b_ref[...].astype(jnp.float32)   # bias/ReLU only once
        o_ref[...] = jnp.maximum(acc, 0.0).astype(o_ref.dtype)


def _linear_relu_tiled_padded(xp, wp, bp, *, tm, tn, tk, vmem_cap):
    """relu(xp @ wp + bp) on ALREADY-PADDED operands; returns the PADDED output
    (no slice / re-pad between chained layers)."""
    pB, p_in = xp.shape
    p_in_w, p_out = wp.shape
    assert p_in == p_in_w and pB % tm == 0 and p_in % tk == 0 and p_out % tn == 0

    x_isz = jnp.dtype(xp.dtype).itemsize
    w_isz = jnp.dtype(wp.dtype).itemsize
    flops = 2 * pB * p_in * p_out
    bytes_accessed = (xp.size * x_isz + wp.size * w_isz + bp.size * w_isz
                      + pB * p_out * x_isz)
    footprint = (2 * tm * tk * x_isz + 2 * tk * tn * w_isz + 2 * tn * w_isz
                 + 2 * tm * tn * x_isz + tm * tn * 4)
    vmem_limit = int(min(vmem_cap, max(footprint + (4 << 20), 32 << 20)))

    vmem = pltpu.MemorySpace.VMEM
    return pl.pallas_call(
        _linear_relu_tiled_kernel,
        out_shape=jax.ShapeDtypeStruct((pB, p_out), xp.dtype),
        grid=(pB // tm, p_out // tn, p_in // tk),
        in_specs=[
            pl.BlockSpec((tm, tk), lambda i, j, k: (i, k), memory_space=vmem),
            pl.BlockSpec((tk, tn), lambda i, j, k: (k, j), memory_space=vmem),
            pl.BlockSpec((1, tn), lambda i, j, k: (0, j), memory_space=vmem),
        ],
        out_specs=pl.BlockSpec((tm, tn), lambda i, j, k: (i, j), memory_space=vmem),
        scratch_shapes=[pltpu.VMEM((tm, tn), jnp.float32)],
        compiler_params=pltpu.CompilerParams(
            dimension_semantics=("parallel", "parallel", "arbitrary"),
            vmem_limit_bytes=vmem_limit),
        cost_estimate=pl.CostEstimate(
            flops=flops, transcendentals=0, bytes_accessed=bytes_accessed),
    )(xp, wp, bp)


# ----------------------------------------------------------------------------
# The MLP wrapper: pads params ONCE, models VMEM, dispatches fused vs tiled.
# ----------------------------------------------------------------------------
class PallasMLP:
    """dropout=None, batch_norm=None, activation=ReLU -> chain of (Linear, ReLU)."""

    def __init__(self, params, *, force_tiled=False, tiled_tile_cap=512):
        self.params = params
        self.num_layers = len(params)
        self.dims = [params[0][0].shape[0]] + [w.shape[1] for w, _ in params]
        self.param_dtype = params[0][0].dtype
        self._param_isz = jnp.dtype(self.param_dtype).itemsize   # weight dtype, not x dtype
        self._vmem_cap = _vmem_capacity_bytes()
        self._single_buffer_ok = True
        self._tile_cap = int(tiled_tile_cap)

        # Lane-dense padded feature dims for the fused path.
        self.fused_pdims = [_round_up(d, 128) for d in self.dims]

        # Real footprint model (single-buffered weights) vs per-TC VMEM capacity.
        tm_guess = _default_fused_tm()
        self.use_fused = (not force_tiled) and (
            self._fused_footprint(tm_guess, weight_bufs=1) <= int(0.9 * self._vmem_cap))

        # Pad all weights/biases ONCE (hoisted out of the per-call path).
        if self.use_fused:
            pd = self.fused_pdims
            fused = []
            for l, (w, b) in enumerate(params):
                pin, pout = pd[l], pd[l + 1]
                wp = jnp.pad(w, ((0, pin - w.shape[0]), (0, pout - w.shape[1])))
                bp = jnp.pad(b, (0, pout - b.shape[0])).reshape(1, pout)
                fused += [wp, bp]
            self.fused_padded = [jax.device_put(p) for p in fused]
        else:
            self.tiled_pdims, self.tiled_tiles = [], []
            for d in self.dims:
                d128 = _round_up(d, 128)
                t = min(self._tile_cap, d128)
                self.tiled_tiles.append(t)
                self.tiled_pdims.append(_round_up(d128, t))
            tiled = []
            for l, (w, b) in enumerate(params):
                pin, pout = self.tiled_pdims[l], self.tiled_pdims[l + 1]
                wp = jnp.pad(w, ((0, pin - w.shape[0]), (0, pout - w.shape[1])))
                bp = jnp.pad(b, (0, pout - b.shape[0])).reshape(1, pout)
                tiled.append((jax.device_put(wp), jax.device_put(bp)))
            self.tiled_padded = tiled

    # VMEM footprint of the fused call: weights x buffer_count + in/out tiles
    # (double-buffered) + live f32 accumulator/activation copies.
    def _fused_footprint(self, tm, weight_bufs):
        pd = self.fused_pdims
        isz = self._param_isz
        weight_bytes = sum((pd[l] * pd[l + 1] + pd[l + 1]) * isz
                           for l in range(self.num_layers))
        io_tiles = 2 * tm * pd[0] * isz + 2 * tm * pd[-1] * isz
        live = 3 * tm * max(pd) * 4
        return weight_bufs * weight_bytes + io_tiles + live

    def __call__(self, x):
        assert x.ndim == 2 and x.shape[1] == self.dims[0]
        if self.use_fused:
            return self._forward_fused(x)
        return self._forward_tiled(x)

    def _forward_fused(self, x):
        B, in_dim = x.shape
        pd = self.fused_pdims
        pB = _round_up(B, 8)
        tm = min(_default_fused_tm(), pB)
        # >=2 batch tiles whenever the batch permits, so megacore "parallel"
        # sharding keeps both v7x TensorCores busy.
        if tm == pB and pB >= 16:
            tm = _round_up(pB // 2, 8)
        pB = _round_up(pB, tm)

        # Only the activation is padded per call; padded K columns contribute 0,
        # padded output columns are relu(0)=0, padded batch rows are sliced off.
        xp = jnp.pad(x, ((0, pB - B), (0, pd[0] - in_dim)))

        x_isz = jnp.dtype(x.dtype).itemsize
        flops = sum(2 * pB * pd[l] * pd[l + 1] for l in range(self.num_layers))
        bytes_accessed = (xp.size * x_isz + pB * pd[-1] * x_isz
                          + sum(p.size for p in self.fused_padded) * self._param_isz)
        # Scoped-VMEM limit: worst case (double-buffered weights) + headroom,
        # clipped to the chip's per-TC capacity.
        vmem_limit = int(min(self._vmem_cap,
                             max(self._fused_footprint(tm, weight_bufs=2) + (4 << 20),
                                 32 << 20)))

        def run(single_buffer):
            call = _build_fused_call(self.num_layers, tm, pd, x.dtype, pB,
                                     single_buffer, vmem_limit, flops, bytes_accessed)
            return call(xp, *self.fused_padded)

        if self._single_buffer_ok:
            try:
                out = run(True)
            except Exception:
                self._single_buffer_ok = False     # pl.Buffered(1) not supported here
                out = run(False)
        else:
            out = run(False)
        return out[:B, :self.dims[-1]]

    def _forward_tiled(self, x):
        B, in_dim = x.shape
        pd = self.tiled_pdims
        pB8 = _round_up(B, 8)
        tm = min(self._tile_cap, pB8)
        pB = _round_up(pB8, tm)
        # Pad once; keep the PADDED activation through the whole chain and slice
        # only at the end (no intermediate slice + re-pad HBM passes).
        h = jnp.pad(x, ((0, pB - B), (0, pd[0] - in_dim)))
        for l, (wp, bp) in enumerate(self.tiled_padded):
            h = _linear_relu_tiled_padded(
                h, wp, bp,
                tm=tm, tn=self.tiled_tiles[l + 1], tk=self.tiled_tiles[l],
                vmem_cap=self._vmem_cap)
        return h[:B, :self.dims[-1]]


# ----------------------------------------------------------------------------
# Parameter init (matches the PyTorch module).
# ----------------------------------------------------------------------------
def xavier_uniform(key, fan_in, fan_out, dtype=jnp.float32):
    # Matches torch.nn.init.xavier_uniform_ (gain=1).
    limit = math.sqrt(6.0 / (fan_in + fan_out))
    return jax.random.uniform(key, (fan_in, fan_out), dtype, -limit, limit)


def init_mlp_params(key, fc_in_dim, fc_dims, dtype=jnp.float32):
    # dtype=jnp.bfloat16 halves HBM/VMEM traffic and doubles MXU rate on v6e/v7x;
    # f32 accumulation inside the kernels is kept either way.
    layer_dims = [fc_in_dim] + list(fc_dims)
    params = []
    for i in range(len(layer_dims) - 1):
        key, wk, bk = jax.random.split(key, 3)
        in_d, out_d = layer_dims[i], layer_dims[i + 1]
        w = xavier_uniform(wk, in_d, out_d, dtype)      # stored [in, out] = W^T
        bound = 1.0 / math.sqrt(in_d)                   # nn.Linear default bias init
        b = jax.random.uniform(bk, (out_d,), dtype, -bound, bound)
        params.append((w, b))
    return params


if __name__ == "__main__":
    key = jax.random.PRNGKey(0)
    batch = 32
    fc_in_dim = 32
    fc_dims = [64, 32]

    key, pk, xk = jax.random.split(key, 3)
    params = init_mlp_params(pk, fc_in_dim, fc_dims, dtype=jnp.float32)
    x = jax.random.normal(xk, (batch, fc_in_dim), jnp.float32)

    # Reference: plain JAX, same semantics as the PyTorch nn.Sequential.
    ref = x
    for w, b in params:
        ref = jnp.maximum(ref @ w + b, 0.0)

    # Fused whole-MLP path (pads hoisted to construction, >=2 batch tiles).
    mlp = PallasMLP(params)
    y = jax.block_until_ready(mlp(x))
    assert y.shape == (batch, fc_dims[-1])
    assert jnp.allclose(y, ref, atol=1e-5, rtol=1e-5)

    # Second call reuses the cached pre-padded params (no per-call weight pads).
    y_again = jax.block_until_ready(mlp(x))
    assert jnp.allclose(y_again, ref, atol=1e-5, rtol=1e-5)

    # bf16 params/activations (recommended on v6e/v7x); f32 MXU accumulation kept.
    params_bf16 = [(w.astype(jnp.bfloat16), b.astype(jnp.bfloat16)) for w, b in params]
    mlp_bf16 = PallasMLP(params_bf16)
    y_bf16 = jax.block_until_ready(mlp_bf16(x.astype(jnp.bfloat16)))
    assert y_bf16.shape == (batch, fc_dims[-1])
    assert jnp.allclose(y_bf16.astype(jnp.float32), ref, atol=1e-1, rtol=1e-1)

    # Exercise the (M, N, K)-tiled fallback with a 2-step K reduction (tile cap 128
    # forces grid (1, 2, 2) through the pl.when-guarded f32 accumulator).
    key, wk, bk, xk2 = jax.random.split(key, 4)
    x2 = jax.random.normal(xk2, (16, 160), jnp.float32)
    w2 = xavier_uniform(wk, 160, 192)
    b2 = jax.random.uniform(bk, (192,), jnp.float32, -0.1, 0.1)
    mlp2 = PallasMLP([(w2, b2)], force_tiled=True, tiled_tile_cap=128)
    y2 = jax.block_until_ready(mlp2(x2))
    ref2 = jnp.maximum(x2 @ w2 + b2, 0.0)
    assert y2.shape == (16, 192)
    assert jnp.allclose(y2, ref2, atol=1e-4, rtol=1e-4)

    # TODO(synk): dropout / batch_norm branches of the PyTorch module (disabled by
    # default) are not implemented in these kernels.
    print("KERNEL_OK")
</pallas_src>

<mosaic_0001>
module attributes {stable_mosaic.version = 11 : i64} {
  func.func @kernel(%arg0: i32, %arg1: memref<16x128xf32, #tpu.memory_space<vmem>>, %arg2: memref<128x128xf32, #tpu.memory_space<vmem>>, %arg3: memref<1x128xf32, #tpu.memory_space<vmem>>, %arg4: memref<128x128xf32, #tpu.memory_space<vmem>>, %arg5: memref<1x128xf32, #tpu.memory_space<vmem>>, %arg6: memref<16x128xf32, #tpu.memory_space<vmem>>) attributes {dimension_semantics = [#tpu.dimension_semantics<parallel>], iteration_bounds = array<i64: 2>, scalar_prefetch = 0 : i64, scratch_operands = 0 : i64, tpu.core_type = #tpu.core_type<tc>, window_params = [{transform_indices = @transform_0, window_bounds = array<i64: 16, 128>}, {pipeline_mode = #tpu.pipeline_mode<synchronous>, transform_indices = @transform_1, window_bounds = array<i64: 128, 128>}, {pipeline_mode = #tpu.pipeline_mode<synchronous>, transform_indices = @transform_2, window_bounds = array<i64: 1, 128>}, {pipeline_mode = #tpu.pipeline_mode<synchronous>, transform_indices = @transform_3, window_bounds = array<i64: 128, 128>}, {pipeline_mode = #tpu.pipeline_mode<synchronous>, transform_indices = @transform_4, window_bounds = array<i64: 1, 128>}, {transform_indices = @transform_5, window_bounds = array<i64: 16, 128>}]} {
    %c0 = arith.constant 0 : index
    %c0_0 = arith.constant 0 : index
    %0 = vector.load %arg1[%c0, %c0_0] : memref<16x128xf32, #tpu.memory_space<vmem>>, vector<16x128xf32>
    %c0_1 = arith.constant 0 : index
    %c0_2 = arith.constant 0 : index
    %1 = vector.load %arg2[%c0_1, %c0_2] : memref<128x128xf32, #tpu.memory_space<vmem>>, vector<128x128xf32>
    %c0_3 = arith.constant 0 : index
    %c0_4 = arith.constant 0 : index
    %2 = vector.load %arg3[%c0_3, %c0_4] : memref<1x128xf32, #tpu.memory_space<vmem>>, vector<1x128xf32>
    %cst = arith.constant dense<0.000000e+00> : vector<16x128xf32>
    %3 = tpu.matmul %0, %1, %cst {dimension_numbers = #tpu.dot_dimension_numbers<[1], [0], [0], [1], [0, 0, 1, 1], [], []>} : vector<16x128xf32>, vector<128x128xf32>, vector<16x128xf32> -> vector<16x128xf32>
    %4 = vector.broadcast %2 : vector<1x128xf32> to vector<16x128xf32>
    %5 = arith.addf %3, %4 : vector<16x128xf32>
    %cst_5 = arith.constant 0.000000e+00 : f32
    %6 = vector.broadcast %cst_5 : f32 to vector<16x128xf32>
    %7 = arith.maximumf %5, %6 : vector<16x128xf32>
    %c0_6 = arith.constant 0 : index
    %c0_7 = arith.constant 0 : index
    %8 = vector.load %arg4[%c0_6, %c0_7] : memref<128x128xf32, #tpu.memory_space<vmem>>, vector<128x128xf32>
    %c0_8 = arith.constant 0 : index
    %c0_9 = arith.constant 0 : index
    %9 = vector.load %arg5[%c0_8, %c0_9] : memref<1x128xf32, #tpu.memory_space<vmem>>, vector<1x128xf32>
    %cst_10 = arith.constant dense<0.000000e+00> : vector<16x128xf32>
    %10 = tpu.matmul %7, %8, %cst_10 {dimension_numbers = #tpu.dot_dimension_numbers<[1], [0], [0], [1], [0, 0, 1, 1], [], []>} : vector<16x128xf32>, vector<128x128xf32>, vector<16x128xf32> -> vector<16x128xf32>
    %11 = vector.broadcast %9 : vector<1x128xf32> to vector<16x128xf32>
    %12 = arith.addf %10, %11 : vector<16x128xf32>
    %cst_11 = arith.constant 0.000000e+00 : f32
    %13 = vector.broadcast %cst_11 : f32 to vector<16x128xf32>
    %14 = arith.maximumf %12, %13 : vector<16x128xf32>
    %c0_12 = arith.constant 0 : index
    %c0_13 = arith.constant 0 : index
    %15 = vector.load %arg6[%c0_12, %c0_13] : memref<16x128xf32, #tpu.memory_space<vmem>>, vector<16x128xf32>
    tpu.vector_store %arg6[%c0_12, %c0_13], %14 {strides = array<i32>} : memref<16x128xf32, #tpu.memory_space<vmem>>, vector<16x128xf32>,
    return
  }
  func.func @transform_0(%arg0: i32) -> (i32, i32) {
    %c0_i32 = arith.constant 0 : i32
    %c0_i32_0 = arith.constant 0 : i32
    return %arg0, %c0_i32 : i32, i32
  }
  func.func @transform_1(%arg0: i32) -> (i32, i32) {
    %c0_i32 = arith.constant 0 : i32
    %c0_i32_0 = arith.constant 0 : i32
    %c0_i32_1 = arith.constant 0 : i32
    return %c0_i32, %c0_i32_0 : i32, i32
  }
  func.func @transform_2(%arg0: i32) -> (i32, i32) {
    %c0_i32 = arith.constant 0 : i32
    %c0_i32_0 = arith.constant 0 : i32
    %c0_i32_1 = arith.constant 0 : i32
    return %c0_i32, %c0_i32_0 : i32, i32
  }
  func.func @transform_3(%arg0: i32) -> (i32, i32) {
    %c0_i32 = arith.constant 0 : i32
    %c0_i32_0 = arith.constant 0 : i32
    %c0_i32_1 = arith.constant 0 : i32
    return %c0_i32, %c0_i32_0 : i32, i32
  }
  func.func @transform_4(%arg0: i32) -> (i32, i32) {
    %c0_i32 = arith.constant 0 : i32
    %c0_i32_0 = arith.constant 0 : i32
    %c0_i32_1 = arith.constant 0 : i32
    return %c0_i32, %c0_i32_0 : i32, i32
  }
  func.func @transform_5(%arg0: i32) -> (i32, i32) {
    %c0_i32 = arith.constant 0 : i32
    %c0_i32_0 = arith.constant 0 : i32
    return %arg0, %c0_i32 : i32, i32
  }
}

module attributes {stable_mosaic.version = 11 : i64} {
  func.func @kernel(%arg0: i32, %arg1: memref<16x128xf32, #tpu.memory_space<vmem>>, %arg2: memref<128x128xf32, #tpu.memory_space<vmem>>, %arg3: memref<1x128xf32, #tpu.memory_space<vmem>>, %arg4: memref<128x128xf32, #tpu.memory_space<vmem>>, %arg5: memref<1x128xf32, #tpu.memory_space<vmem>>, %arg6: memref<16x128xf32, #tpu.memory_space<vmem>>) attributes {dimension_semantics = [#tpu.dimension_semantics<parallel>], iteration_bounds = array<i64: 2>, scalar_prefetch = 0 : i64, scratch_operands = 0 : i64, tpu.core_type = #tpu.core_type<tc>, window_params = [{transform_indices = @transform_0, window_bounds = array<i64: 16, 128>}, {pipeline_mode = #tpu.pipeline_mode<synchronous>, transform_indices = @transform_1, window_bounds = array<i64: 128, 128>}, {pipeline_mode = #tpu.pipeline_mode<synchronous>, transform_indices = @transform_2, window_bounds = array<i64: 1, 128>}, {pipeline_mode = #tpu.pipeline_mode<synchronous>, transform_indices = @transform_3, window_bounds = array<i64: 128, 128>}, {pipeline_mode = #tpu.pipeline_mode<synchronous>, transform_indices = @transform_4, window_bounds = array<i64: 1, 128>}, {transform_indices = @transform_5, window_bounds = array<i64: 16, 128>}]} {
    %c0 = arith.constant 0 : index
    %c0_0 = arith.constant 0 : index
    %0 = vector.load %arg1[%c0, %c0_0] : memref<16x128xf32, #tpu.memory_space<vmem>>, vector<16x128xf32>
    %c0_1 = arith.constant 0 : index
    %c0_2 = arith.constant 0 : index
    %1 = vector.load %arg2[%c0_1, %c0_2] : memref<128x128xf32, #tpu.memory_space<vmem>>, vector<128x128xf32>
    %c0_3 = arith.constant 0 : index
    %c0_4 = arith.constant 0 : index
    %2 = vector.load %arg3[%c0_3, %c0_4] : memref<1x128xf32, #tpu.memory_space<vmem>>, vector<1x128xf32>
    %cst = arith.constant dense<0.000000e+00> : vector<16x128xf32>
    %3 = tpu.matmul %0, %1, %cst {dimension_numbers = #tpu.dot_dimension_numbers<[1], [0], [0], [1], [0, 0, 1, 1], [], []>} : vector<16x128xf32>, vector<128x128xf32>, vector<16x128xf32> -> vector<16x128xf32>
    %4 = vector.broadcast %2 : vector<1x128xf32> to vector<16x128xf32>
    %5 = arith.addf %3, %4 : vector<16x128xf32>
    %cst_5 = arith.constant 0.000000e+00 : f32
    %6 = vector.broadcast %cst_5 : f32 to vector<16x128xf32>
    %7 = arith.maximumf %5, %6 : vector<16x128xf32>
    %c0_6 = arith.constant 0 : index
    %c0_7 = arith.constant 0 : index
    %8 = vector.load %arg4[%c0_6, %c0_7] : memref<128x128xf32, #tpu.memory_space<vmem>>, vector<128x128xf32>
    %c0_8 = arith.constant 0 : index
    %c0_9 = arith.constant 0 : index
    %9 = vector.load %arg5[%c0_8, %c0_9] : memref<1x128xf32, #tpu.memory_space<vmem>>, vector<1x128xf32>
    %cst_10 = arith.constant dense<0.000000e+00> : vector<16x128xf32>
    %10 = tpu.matmul %7, %8, %cst_10 {dimension_numbers = #tpu.dot_dimension_numbers<[1], [0], [0], [1], [0, 0, 1, 1], [], []>} : vector<16x128xf32>, vector<128x128xf32>, vector<16x128xf32> -> vector<16x128xf32>
    %11 = vector.broadcast %9 : vector<1x128xf32> to vector<16x128xf32>
    %12 = arith.addf %10, %11 : vector<16x128xf32>
    %cst_11 = arith.constant 0.000000e+00 : f32
    %13 = vector.broadcast %cst_11 : f32 to vector<16x128xf32>
    %14 = arith.maximumf %12, %13 : vector<16x128xf32>
    %c0_12 = arith.constant 0 : index
    %c0_13 = arith.constant 0 : index
    %15 = vector.load %arg6[%c0_12, %c0_13] : memref<16x128xf32, #tpu.memory_space<vmem>>, vector<16x128xf32>
    tpu.vector_store %arg6[%c0_12, %c0_13], %14 {strides = array<i32>} : memref<16x128xf32, #tpu.memory_space<vmem>>, vector<16x128xf32>,
    return
  }
  func.func @transform_0(%arg0: i32) -> (i32, i32) {
    %c0_i32 = arith.constant 0 : i32
    %c0_i32_0 = arith.constant 0 : i32
    return %arg0, %c0_i32 : i32, i32
  }
  func.func @transform_1(%arg0: i32) -> (i32, i32) {
    %c0_i32 = arith.constant 0 : i32
    %c0_i32_0 = arith.constant 0 : i32
    %c0_i32_1 = arith.constant 0 : i32
    return %c0_i32, %c0_i32_0 : i32, i32
  }
  func.func @transform_2(%arg0: i32) -> (i32, i32) {
    %c0_i32 = arith.constant 0 : i32
    %c0_i32_0 = arith.constant 0 : i32
    %c0_i32_1 = arith.constant 0 : i32
    return %c0_i32, %c0_i32_0 : i32, i32
  }
  func.func @transform_3(%arg0: i32) -> (i32, i32) {
    %c0_i32 = arith.constant 0 : i32
    %c0_i32_0 = arith.constant 0 : i32
    %c0_i32_1 = arith.constant 0 : i32
    return %c0_i32, %c0_i32_0 : i32, i32
  }
  func.func @transform_4(%arg0: i32) -> (i32, i32) {
    %c0_i32 = arith.constant 0 : i32
    %c0_i32_0 = arith.constant 0 : i32
    %c0_i32_1 = arith.constant 0 : i32
    return %c0_i32, %c0_i32_0 : i32, i32
  }
  func.func @transform_5(%arg0: i32) -> (i32, i32) {
    %c0_i32 = arith.constant 0 : i32
    %c0_i32_0 = arith.constant 0 : i32
    return %arg0, %c0_i32 : i32, i32
  }
}

</mosaic_0001>

<llo_original>
// kernel: tpu_custom_call.1
$region0: #{tpu_custom_call.1}
  #allocation0 [shape = 'u32[]', space=smem, size = 0x4, offset = 0x4, fixed_abs, tag = 'smem constant byte address 0x4 - core index']
  #allocation1 [shape = 'u32[144,128]{1,0:T(1,128)}', space=vmem, size = 0x12000, scoped, tag = 'internal scratch']
  %s0 = inlined_call_operand.hbm [shape: f32[32,128], index: 0, kind: input, shape index: {}]
  %s1 = inlined_call_operand.hbm [shape: f32[128,128], index: 1, kind: input, shape index: {}]
  %s2 = inlined_call_operand.vmem [shape: f32[1,128], index: 2, kind: input, shape index: {}]
  %s3 = inlined_call_operand.hbm [shape: f32[128,128], index: 3, kind: input, shape index: {}]
  %s4 = inlined_call_operand.vmem [shape: f32[1,128], index: 4, kind: input, shape index: {}]
  %s5 = inlined_call_operand.hbm [shape: f32[32,128], index: 5, kind: output, shape index: {}]
  %s6 = sld [smem:[#allocation0]]
  $region65: #{tpu_custom_call.1} parent=0
    _
  %s8 = ssub.s32 1, %s6
  %s9 = scalar_select 0, %s8, %s6
  $region1: #{tpu_custom_call.1} parent=0
    #allocation2 [shape = 'u8[16384]{0}', space=vmem, size = 0x4000, scoped, tag = 'input window, operand 0']
    #allocation3 [shape = 's32[2]{0}', space=sflag, size = 0x8, scoped, tag = 'scoped memory for tpu_custom_call.1']
    #allocation4 [shape = 's32[2]{0}', space=sflag, size = 0x8, scoped, tag = 'scoped memory for tpu_custom_call.1']
    #allocation5 [shape = 'u8[65536]{0}', space=vmem, size = 0x10000, scoped, tag = 'input window, operand 1, single buffered']
    #allocation6 [shape = 's32[1]{0}', space=sflag, size = 0x4, scoped, tag = 'scoped memory for tpu_custom_call.1']
    #allocation7 [shape = 'u8[65536]{0}', space=vmem, size = 0x10000, scoped, tag = 'input window, operand 3, single buffered']
    #allocation8 [shape = 'u8[16384]{0}', space=vmem, size = 0x4000, scoped, tag = 'output window, operand 0']
    %10 = vsyncpa [#allocation3], 0
    %s11 = scalar_lea.sflag [#allocation3], 1
    %12 = vsyncpa %s11, 0
    %13 = vsyncpa [#allocation6], 0
    %14 = vsyncpa [#allocation4], 0
    %s15 = scalar_lea.sflag [#allocation4], 1
    %16 = vsyncpa %s15, 0
    loop: start=0, step=1, limit=4
    $region2: #{tpu_custom_call.1} parent=1 // loop_pre_header
      _
    $region3: #{tpu_custom_call.1} parent=1 // loop_header
      %s18 = sphi 0, %s22
      %p19 = scmp.ge.s32.totalorder %s18, 4
      %s28 = sphi 0, %s30
      %s31 = sphi 0, %s28
      %s32 = sphi 0, %s31
      %s48 = sphi 0, %s32
      %s52 = sphi 0, %s52
      %s54 = sphi 0, %s52
      %s55 = sphi 0, %s54
      %s69 = sphi 0, %s55
      %s73 = sphi 0, %s73
      %s75 = sphi 0, %s73
      %s76 = sphi 0, %s75
      %s90 = sphi 0, %s76
      %s94 = sphi 0, %s94
      %s96 = sphi 0, %s94
      %s97 = sphi 0, %s96
      %s111 = sphi 0, %s97
      %s115 = sphi 0, %s115
      %s117 = sphi 0, %s115
      %s118 = sphi 0, %s117
      %s132 = sphi 0, %s118
      %s138 = sphi 0, %s140
      %s141 = sphi 0, %s138
      %s142 = sphi 0, %s141
      %s158 = sphi 0, %s142
    $region4: #{tpu_custom_call.1} parent=1 // loop_header_branch
      %21 = sbr.rel (%p19) target = $region8
    $region5: #{tpu_custom_call.1} parent=1 // loop_body
      %s23 = ssub.s32 %s18, 1
      %s24 = ssub.s32 %s18, 2
      %s25 = sadd.s32 %s18, 1
      %s26 = ssub.s32 %s18, %s25
      %p27 = scmp.eq.s32.totalorder %s26, 0
      %s29 = sadd.s32 %s28, 1
      %s30 = scalar_select %p27, %s28, %s29
      %p33 = pneg %p27
      %p34 = scmp.eq.s32.totalorder %s18, 1
      %p35 = por %p33, %p34
      %p36 = scmp.ne.s32.totalorder %s28, %s31
      %p37 = scmp.eq.s32.totalorder %s18, 0
      %p38 = por %p36, %p37
      %p39 = scmp.ne.s32.totalorder %s28, %s31
      %p40 = scmp.eq.s32.totalorder %s23, 1
      %p41 = por %p39, %p40
      %p42 = scmp.ne.s32.totalorder %s31, %s32
      %p43 = scmp.eq.s32.totalorder %s23, 0
      %p44 = por %p42, %p43
      %p45 = scmp.ne.s32.totalorder %s31, %s32
      %p46 = scmp.eq.s32.totalorder %s24, 1
      %p47 = por %p45, %p46
      %p49 = scmp.ne.s32.totalorder %s32, %s48
      %p50 = scmp.eq.s32.totalorder %s24, 0
      %p51 = por %p49, %p50
      %s53 = sadd.s32 %s52, 1
      %p56 = scmp.eq.s32.totalorder %s18, 1
      %p57 = scmp.ne.s32.totalorder %s52, %s54
      %p58 = scmp.eq.s32.totalorder %s18, 0
      %p59 = por %p57, %p58
      %p60 = scmp.ne.s32.totalorder %s52, %s54
      %p61 = scmp.eq.s32.totalorder %s23, 1
      %p62 = por %p60, %p61
      %p63 = scmp.ne.s32.totalorder %s54, %s55
      %p64 = scmp.eq.s32.totalorder %s23, 0
      %p65 = por %p63, %p64
      %p66 = scmp.ne.s32.totalorder %s54, %s55
      %p67 = scmp.eq.s32.totalorder %s24, 1
      %p68 = por %p66, %p67
      %p70 = scmp.ne.s32.totalorder %s55, %s69
      %p71 = scmp.eq.s32.totalorder %s24, 0
      %p72 = por %p70, %p71
      %s74 = sadd.s32 %s73, 1
      %p77 = scmp.eq.s32.totalorder %s18, 1
      %p78 = scmp.ne.s32.totalorder %s73, %s75
      %p79 = scmp.eq.s32.totalorder %s18, 0
      %p80 = por %p78, %p79
      %p81 = scmp.ne.s32.totalorder %s73, %s75
      %p82 = scmp.eq.s32.totalorder %s23, 1
      %p83 = por %p81, %p82
      %p84 = scmp.ne.s32.totalorder %s75, %s76
      %p85 = scmp.eq.s32.totalorder %s23, 0
      %p86 = por %p84, %p85
      %p87 = scmp.ne.s32.totalorder %s75, %s76
      %p88 = scmp.eq.s32.totalorder %s24, 1
      %p89 = por %p87, %p88
      %p91 = scmp.ne.s32.totalorder %s76, %s90
      %p92 = scmp.eq.s32.totalorder %s24, 0
      %p93 = por %p91, %p92
      %s95 = sadd.s32 %s94, 1
      %p98 = scmp.eq.s32.totalorder %s18, 1
      %p99 = scmp.ne.s32.totalorder %s94, %s96
      %p100 = scmp.eq.s32.totalorder %s18, 0
      %p101 = por %p99, %p100
      %p102 = scmp.ne.s32.totalorder %s94, %s96
      %p103 = scmp.eq.s32.totalorder %s23, 1
      %p104 = por %p102, %p103
      %p105 = scmp.ne.s32.totalorder %s96, %s97
      %p106 = scmp.eq.s32.totalorder %s23, 0
      %p107 = por %p105, %p106
      %p108 = scmp.ne.s32.totalorder %s96, %s97
      %p109 = scmp.eq.s32.totalorder %s24, 1
      %p110 = por %p108, %p109
      %p112 = scmp.ne.s32.totalorder %s97, %s111
      %p113 = scmp.eq.s32.totalorder %s24, 0
      %p114 = por %p112, %p113
      %s116 = sadd.s32 %s115, 1
      %p119 = scmp.eq.s32.totalorder %s18, 1
      %p120 = scmp.ne.s32.totalorder %s115, %s117
      %p121 = scmp.eq.s32.totalorder %s18, 0
      %p122 = por %p120, %p121
      %p123 = scmp.ne.s32.totalorder %s115, %s117
      %p124 = scmp.eq.s32.totalorder %s23, 1
      %p125 = por %p123, %p124
      %p126 = scmp.ne.s32.totalorder %s117, %s118
      %p127 = scmp.eq.s32.totalorder %s23, 0
      %p128 = por %p126, %p127
      %p129 = scmp.ne.s32.totalorder %s117, %s118
      %p130 = scmp.eq.s32.totalorder %s24, 1
      %p131 = por %p129, %p130
      %p133 = scmp.ne.s32.totalorder %s118, %s132
      %p134 = scmp.eq.s32.totalorder %s24, 0
      %p135 = por %p133, %p134
      %s136 = ssub.s32 %s18, %s25
      %p137 = scmp.eq.s32.totalorder %s136, 0
      %s139 = sadd.s32 %s138, 1
      %s140 = scalar_select %p137, %s138, %s139
      %p143 = pneg %p137
      %p144 = scmp.eq.s32.totalorder %s18, 1
      %p145 = por %p143, %p144
      %p146 = scmp.ne.s32.totalorder %s138, %s141
      %p147 = scmp.eq.s32.totalorder %s18, 0
      %p148 = por %p146, %p147
      %p149 = scmp.ne.s32.totalorder %s138, %s141
      %p150 = scmp.eq.s32.totalorder %s23, 1
      %p151 = por %p149, %p150
      %p152 = scmp.ne.s32.totalorder %s141, %s142
      %p153 = scmp.eq.s32.totalorder %s23, 0
      %p154 = por %p152, %p153
      %p155 = scmp.ne.s32.totalorder %s141, %s142
      %p156 = scmp.eq.s32.totalorder %s24, 1
      %p157 = por %p155, %p156
      %p159 = scmp.ne.s32.totalorder %s142, %s158
      %p160 = scmp.eq.s32.totalorder %s24, 0
      %p161 = por %p159, %p160
      %p162 = scmp.le.s32.totalorder 1, %s18
      %p163 = scmp.lt.s32.totalorder %s18, 3
      %p164 = pnand %p162, %p163
      %p165 = pneg %p164
      // Predicated region
      $region9: #{tpu_custom_call.1} parent=5 // pred_check
        _
      $region10: #{tpu_custom_call.1} parent=5 // pred_check_branch
        %167 = sbr.rel (%p164) target = $region12
      $region11: #{tpu_custom_call.1} parent=5 // pred_region
        %s168 = ssub.s32 %s18, 1
        // Predicated region
        $region13: #{tpu_custom_call.1} parent=11 // pred_check
          %p169 = pneg %p65
        $region14: #{tpu_custom_call.1} parent=11 // pred_check_branch
          %171 = sbr.rel (%p169) target = $region16
        $region15: #{tpu_custom_call.1} parent=11 // pred_region
          %s173 = ssub.s32 2048, 2048
          %174 = vsyncadd [#allocation6], %s173
          %s175 = sshll.u32 [#allocation5], 4
          %s176 = int_to_ptr.vmem [resolvable:$true] %s175
          %181 = dma.hbm_to_vmem [thread:$0]  %s1, 2048, %s176, [#allocation6], 128, 128, 8
        $region16: #{tpu_custom_call.1} parent=11 // pred_fallthru
          _
        // Predicated region
        $region17: #{tpu_custom_call.1} parent=11 // pred_check
          %p182 = pneg %p86
        $region18: #{tpu_custom_call.1} parent=11 // pred_check_branch
          %184 = sbr.rel (%p182) target = $region20
        $region19: #{tpu_custom_call.1} parent=11 // pred_region
          _
        $region20: #{tpu_custom_call.1} parent=11 // pred_fallthru
          _
        // Predicated region
        $region21: #{tpu_custom_call.1} parent=11 // pred_check
          %p185 = pneg %p107
        $region22: #{tpu_custom_call.1} parent=11 // pred_check_branch
          %187 = sbr.rel (%p185) target = $region24
        $region23: #{tpu_custom_call.1} parent=11 // pred_region
          %s189 = ssub.s32 2048, 2048
          %190 = vsyncadd [#allocation6], %s189
          %s191 = sshll.u32 [#allocation7], 4
          %s192 = int_to_ptr.vmem [resolvable:$true] %s191
          %197 = dma.hbm_to_vmem [thread:$0]  %s3, 2048, %s192, [#allocation6], 128, 128, 8
        $region24: #{tpu_custom_call.1} parent=11 // pred_fallthru
          _
        // Predicated region
        $region25: #{tpu_custom_call.1} parent=11 // pred_check
          %p198 = pneg %p128
        $region26: #{tpu_custom_call.1} parent=11 // pred_check_branch
          %200 = sbr.rel (%p198) target = $region28
        $region27: #{tpu_custom_call.1} parent=11 // pred_region
          _
        $region28: #{tpu_custom_call.1} parent=11 // pred_fallthru
          _
      $region12: #{tpu_custom_call.1} parent=5 // pred_fallthru
        _
      %p201 = scmp.lt.s32.totalorder %s18, 2
      // Predicated region
      $region29: #{tpu_custom_call.1} parent=5 // pred_check
        %p202 = pneg %p201
      $region30: #{tpu_custom_call.1} parent=5 // pred_check_branch
        %204 = sbr.rel (%p202) target = $region32
      $region31: #{tpu_custom_call.1} parent=5 // pred_region
        // Predicated region
        $region33: #{tpu_custom_call.1} parent=31 // pred_check
          %p205 = pneg %p38
        $region34: #{tpu_custom_call.1} parent=31 // pred_check_branch
          %207 = sbr.rel (%p205) target = $region36
        $region35: #{tpu_custom_call.1} parent=31 // pred_region
          %s208 = sand.u32 %s28, 1
          %s209 = scalar_lea.sflag [#allocation3], %s208
          %s210 = sand.u32 %s28, 1
          %s211 = smul.addr %s210, 16
          %s212 = scalar_lea.vmem [#allocation2], %s211
          %s213 = smul.u32 2, %s18
          %s215 = ssub.s32 256, 256
          %216 = vsyncadd %s209, %s215
          %s217 = smul.addr %s213, 128
          %s218 = scalar_lea.hbm %s0, %s217
          %s219 = sshll.u32 %s212, 4
          %s220 = int_to_ptr.vmem [resolvable:$true] %s219
          %225 = dma.hbm_to_vmem [thread:$0]  %s218, 256, %s220, %s209, 128, 128, 8
        $region36: #{tpu_custom_call.1} parent=31 // pred_fallthru
          _
      $region32: #{tpu_custom_call.1} parent=5 // pred_fallthru
        _
      %p226 = scmp.le.s32.totalorder 1, %s18
      %p227 = scmp.lt.s32.totalorder %s18, 3
      %p228 = pnand %p226, %p227
      %p229 = pneg %p228
      // Predicated region
      $region37: #{tpu_custom_call.1} parent=5 // pred_check
        _
      $region38: #{tpu_custom_call.1} parent=5 // pred_check_branch
        %231 = sbr.rel (%p228) target = $region40
      $region39: #{tpu_custom_call.1} parent=5 // pred_region
        %s232 = ssub.s32 %s18, 1
        %s233 = sand.u32 %s31, 1
        %s234 = scalar_lea.sflag [#allocation3], %s233
        %s235 = sand.u32 %s31, 1
        %s236 = smul.addr %s235, 16
        %s237 = scalar_lea.vmem [#allocation2], %s236
        // Predicated region
        $region41: #{tpu_custom_call.1} parent=39 // pred_check
          %p238 = pneg %p44
        $region42: #{tpu_custom_call.1} parent=39 // pred_check_branch
          %240 = sbr.rel (%p238) target = $region44
        $region43: #{tpu_custom_call.1} parent=39 // pred_region
          %241 = dma.done %s234, 256
        $region44: #{tpu_custom_call.1} parent=39 // pred_fallthru
          _
        // Predicated region
        $region45: #{tpu_custom_call.1} parent=39 // pred_check
          %p242 = pneg %p65
        $region46: #{tpu_custom_call.1} parent=39 // pred_check_branch
          %244 = sbr.rel (%p242) target = $region48
        $region47: #{tpu_custom_call.1} parent=39 // pred_region
          %245 = dma.done [#allocation6], 2048
        $region48: #{tpu_custom_call.1} parent=39 // pred_fallthru
          _
        // Predicated region
        $region49: #{tpu_custom_call.1} parent=39 // pred_check
          %p246 = pneg %p107
        $region50: #{tpu_custom_call.1} parent=39 // pred_check_branch
          %248 = sbr.rel (%p246) target = $region52
        $region51: #{tpu_custom_call.1} parent=39 // pred_region
          %249 = dma.done [#allocation6], 2048
        $region52: #{tpu_custom_call.1} parent=39 // pred_fallthru
          _
        %s250 = sand.u32 %s31, 1
        %s251 = scalar_lea.sflag [#allocation3], %s250
        %s252 = sand.u32 %s31, 1
        %s253 = smul.addr %s252, 16
        %s254 = scalar_lea.vmem [#allocation2], %s253
        %p255 = pneg %p44
        %p256 = pneg %p41
        %p257 = pneg %p65
        %p258 = pneg %p62
        %p259 = pneg %p86
        %p260 = pneg %p83
        %p261 = pneg %p107
        %p262 = pneg %p104
        %p263 = pneg %p128
        %p264 = pneg %p125
        %p265 = pneg %p154
        %p266 = pneg %p151
        %s267 = sand.u32 %s141, 1
        %s268 = scalar_lea.sflag [#allocation4], %s267
        %s269 = sand.u32 %s141, 1
        %s270 = smul.addr %s269, 16
        %s271 = scalar_lea.vmem [#allocation8], %s270
        %s272 = smul.u32 2, %s23
        %s273 = smul.u32 2, %s23
        %v274 = vld [vmem:[%s237] sm:$0xff]
        %v275 = vld [vmem:[%s237 + $0x8] sm:$0xff]
        %v276 = vld [vmem:[#allocation5] sm:$0xff]
        %v277 = vld [vmem:[#allocation5 + $0x8] sm:$0xff]
        %v278 = vld [vmem:[#allocation5 + $0x10] sm:$0xff]
        %v279 = vld [vmem:[#allocation5 + $0x18] sm:$0xff]
        %v280 = vld [vmem:[#allocation5 + $0x20] sm:$0xff]
        %v281 = vld [vmem:[#allocation5 + $0x28] sm:$0xff]
        %v282 = vld [vmem:[#allocation5 + $0x30] sm:$0xff]
        %v283 = vld [vmem:[#allocation5 + $0x38] sm:$0xff]
        %v284 = vld [vmem:[#allocation5 + $0x40] sm:$0xff]
        %v285 = vld [vmem:[#allocation5 + $0x48] sm:$0xff]
        %v286 = vld [vmem:[#allocation5 + $0x50] sm:$0xff]
        %v287 = vld [vmem:[#allocation5 + $0x58] sm:$0xff]
        %v288 = vld [vmem:[#allocation5 + $0x60] sm:$0xff]
        %v289 = vld [vmem:[#allocation5 + $0x68] sm:$0xff]
        %v290 = vld [vmem:[#allocation5 + $0x70] sm:$0xff]
        %v291 = vld [vmem:[#allocation5 + $0x78] sm:$0xff]
        %v292 = vld [vmem:[%s2] sm:$0x1]
        %v294 = vlaneseq
        %v295 = vshrl.u32 %v294, 7
        %v296 = vsub.s32 0, %v295
        %v297 = vrot.slane %v292, %v296
        %299 = vmatprep.subr.mxu0 0.0
        %300 = vmatpush1.msra.mxu0 %v276
        %301 = vmatprep.subr.mxu0 0.0
        %302 = vmatpush1.msra.mxu0 %v277
        %303 = vmatprep.subr.mxu0 0.0
        %304 = vmatpush1.msra.mxu0 %v278
        %305 = vmatprep.subr.mxu0 0.0
        %306 = vmatpush1.msra.mxu0 %v279
        %307 = vmatprep.subr.mxu0 0.0
        %308 = vmatpush1.msra.mxu0 %v280
        %309 = vmatprep.subr.mxu0 0.0
        %310 = vmatpush1.msra.mxu0 %v281
        %311 = vmatprep.subr.mxu0 0.0
        %312 = vmatpush1.msra.mxu0 %v282
        %313 = vmatprep.subr.mxu0 0.0
        %314 = vmatpush1.msra.mxu0 %v283
        %315 = vmatprep.subr.mxu0 0.0
        %316 = vmatpush1.msra.mxu0 %v284
        %317 = vmatprep.subr.mxu0 0.0
        %318 = vmatpush1.msra.mxu0 %v285
        %319 = vmatprep.subr.mxu0 0.0
        %320 = vmatpush1.msra.mxu0 %v286
        %321 = vmatprep.subr.mxu0 0.0
        %322 = vmatpush1.msra.mxu0 %v287
        %323 = vmatprep.subr.mxu0 0.0
        %324 = vmatpush1.msra.mxu0 %v288
        %325 = vmatprep.subr.mxu0 0.0
        %326 = vmatpush1.msra.mxu0 %v289
        %327 = vmatprep.subr.mxu0 0.0
        %328 = vmatpush1.msra.mxu0 %v290
        %329 = vmatprep.subr.mxu0 0.0
        %330 = vmatpush1.msra.mxu0 %v291
        %331 = vmatprep.subr.mxu0 0.0
        %332 = vmatpush1.msra.mxu0 0.0
        %333 = vmatprep.subr.mxu0 0.0
        %334 = vmatpush1.msra.mxu0 0.0
        %335 = vmatprep.subr.mxu0 0.0
        %336 = vmatpush1.msra.mxu0 0.0
        %337 = vmatprep.subr.mxu0 0.0
        %338 = vmatpush1.msra.mxu0 0.0
        %339 = vmatprep.subr.mxu0 0.0
        %340 = vmatpush1.msra.mxu0 0.0
        %341 = vmatprep.subr.mxu0 0.0
        %342 = vmatpush1.msra.mxu0 0.0
        %343 = vmatprep.subr.mxu0 0.0
        %344 = vmatpush1.msra.mxu0 0.0
        %345 = vmatprep.subr.mxu0 0.0
        %346 = vmatpush1.msra.mxu0 0.0
        %347 = vmatprep.subr.mxu0 0.0
        %348 = vmatpush1.msra.mxu0 0.0
        %349 = vmatprep.subr.mxu0 0.0
        %350 = vmatpush1.msra.mxu0 0.0
        %351 = vmatprep.subr.mxu0 0.0
        %352 = vmatpush1.msra.mxu0 0.0
        %353 = vmatprep.subr.mxu0 0.0
        %354 = vmatpush1.msra.mxu0 0.0
        %355 = vmatprep.subr.mxu0 0.0
        %356 = vmatpush1.msra.mxu0 0.0
        %357 = vmatprep.subr.mxu0 0.0
        %358 = vmatpush1.msra.mxu0 0.0
        %359 = vmatprep.subr.mxu0 0.0
        %360 = vmatpush1.msra.mxu0 0.0
        %361 = vmatprep.subr.mxu0 0.0
        %362 = vmatpush1.msra.mxu0 0.0
        %363 = vmatprep.mubr.f32.mxu0 0.0
        %364 = vmatmul.mubr.f32.gmra.mrb[0].mxu0 %v274
        %v365 = vpop.f32.mrb[0].mxu0
        %v366 = vadd.f32 %v297, %v365
        %v367 = vpop.f32.mrb[0].mxu0
        %368 = vmatprep.mubr.f32.mxu0 0.0
        %369 = vmatmul.mubr.f32.gmra.mrb[0].mxu0 %v275
        %v370 = vpop.f32.mrb[0].mxu0
        %v371 = vadd.f32 %v297, %v370
        %v372 = vpop.f32.mrb[0].mxu0
        %373 = vdwg.mxu0
        %v374 = vmax.f32 %v366, 0.0
        %v375 = vmax.f32 %v371, 0.0
        %v376 = vld [vmem:[#allocation7] sm:$0xff]
        %v377 = vld [vmem:[#allocation7 + $0x8] sm:$0xff]
        %v378 = vld [vmem:[#allocation7 + $0x10] sm:$0xff]
        %v379 = vld [vmem:[#allocation7 + $0x18] sm:$0xff]
        %v380 = vld [vmem:[#allocation7 + $0x20] sm:$0xff]
        %v381 = vld [vmem:[#allocation7 + $0x28] sm:$0xff]
        %v382 = vld [vmem:[#allocation7 + $0x30] sm:$0xff]
        %v383 = vld [vmem:[#allocation7 + $0x38] sm:$0xff]
        %v384 = vld [vmem:[#allocation7 + $0x40] sm:$0xff]
        %v385 = vld [vmem:[#allocation7 + $0x48] sm:$0xff]
        %v386 = vld [vmem:[#allocation7 + $0x50] sm:$0xff]
        %v387 = vld [vmem:[#allocation7 + $0x58] sm:$0xff]
        %v388 = vld [vmem:[#allocation7 + $0x60] sm:$0xff]
        %v389 = vld [vmem:[#allocation7 + $0x68] sm:$0xff]
        %v390 = vld [vmem:[#allocation7 + $0x70] sm:$0xff]
        %v391 = vld [vmem:[#allocation7 + $0x78] sm:$0xff]
        %v392 = vld [vmem:[%s4] sm:$0x1]
        %v394 = vlaneseq
        %v395 = vshrl.u32 %v394, 7
        %v396 = vsub.s32 0, %v395
        %v397 = vrot.slane %v392, %v396
        %399 = vmatprep.subr.mxu0 0.0
        %400 = vmatpush1.msra.mxu0 %v376
        %401 = vmatprep.subr.mxu0 0.0
        %402 = vmatpush1.msra.mxu0 %v377
        %403 = vmatprep.subr.mxu0 0.0
        %404 = vmatpush1.msra.mxu0 %v378
        %405 = vmatprep.subr.mxu0 0.0
        %406 = vmatpush1.msra.mxu0 %v379
        %407 = vmatprep.subr.mxu0 0.0
        %408 = vmatpush1.msra.mxu0 %v380
        %409 = vmatprep.subr.mxu0 0.0
        %410 = vmatpush1.msra.mxu0 %v381
        %411 = vmatprep.subr.mxu0 0.0
        %412 = vmatpush1.msra.mxu0 %v382
        %413 = vmatprep.subr.mxu0 0.0
        %414 = vmatpush1.msra.mxu0 %v383
        %415 = vmatprep.subr.mxu0 0.0
        %416 = vmatpush1.msra.mxu0 %v384
        %417 = vmatprep.subr.mxu0 0.0
        %418 = vmatpush1.msra.mxu0 %v385
        %419 = vmatprep.subr.mxu0 0.0
        %420 = vmatpush1.msra.mxu0 %v386
        %421 = vmatprep.subr.mxu0 0.0
        %422 = vmatpush1.msra.mxu0 %v387
        %423 = vmatprep.subr.mxu0 0.0
        %424 = vmatpush1.msra.mxu0 %v388
        %425 = vmatprep.subr.mxu0 0.0
        %426 = vmatpush1.msra.mxu0 %v389
        %427 = vmatprep.subr.mxu0 0.0
        %428 = vmatpush1.msra.mxu0 %v390
        %429 = vmatprep.subr.mxu0 0.0
        %430 = vmatpush1.msra.mxu0 %v391
        %431 = vmatprep.subr.mxu0 0.0
        %432 = vmatpush1.msra.mxu0 0.0
        %433 = vmatprep.subr.mxu0 0.0
        %434 = vmatpush1.msra.mxu0 0.0
        %435 = vmatprep.subr.mxu0 0.0
        %436 = vmatpush1.msra.mxu0 0.0
        %437 = vmatprep.subr.mxu0 0.0
        %438 = vmatpush1.msra.mxu0 0.0
        %439 = vmatprep.subr.mxu0 0.0
        %440 = vmatpush1.msra.mxu0 0.0
        %441 = vmatprep.subr.mxu0 0.0
        %442 = vmatpush1.msra.mxu0 0.0
        %443 = vmatprep.subr.mxu0 0.0
        %444 = vmatpush1.msra.mxu0 0.0
        %445 = vmatprep.subr.mxu0 0.0
        %446 = vmatpush1.msra.mxu0 0.0
        %447 = vmatprep.subr.mxu0 0.0
        %448 = vmatpush1.msra.mxu0 0.0
        %449 = vmatprep.subr.mxu0 0.0
        %450 = vmatpush1.msra.mxu0 0.0
        %451 = vmatprep.subr.mxu0 0.0
        %452 = vmatpush1.msra.mxu0 0.0
        %453 = vmatprep.subr.mxu0 0.0
        %454 = vmatpush1.msra.mxu0 0.0
        %455 = vmatprep.subr.mxu0 0.0
        %456 = vmatpush1.msra.mxu0 0.0
        %457 = vmatprep.subr.mxu0 0.0
        %458 = vmatpush1.msra.mxu0 0.0
        %459 = vmatprep.subr.mxu0 0.0
        %460 = vmatpush1.msra.mxu0 0.0
        %461 = vmatprep.subr.mxu0 0.0
        %462 = vmatpush1.msra.mxu0 0.0
        %463 = vmatprep.mubr.f32.mxu0 0.0
        %464 = vmatmul.mubr.f32.gmra.mrb[0].mxu0 %v374
        %v465 = vpop.f32.mrb[0].mxu0
        %v466 = vadd.f32 %v397, %v465
        %v467 = vpop.f32.mrb[0].mxu0
        %468 = vmatprep.mubr.f32.mxu0 0.0
        %469 = vmatmul.mubr.f32.gmra.mrb[0].mxu0 %v375
        %v470 = vpop.f32.mrb[0].mxu0
        %v471 = vadd.f32 %v397, %v470
        %v472 = vpop.f32.mrb[0].mxu0
        %473 = vdwg.mxu0
        %v474 = vmax.f32 %v466, 0.0
        %v475 = vmax.f32 %v471, 0.0
        %476 = vst [vmem:[%s271] sm:$0xff] %v474
        %477 = vst [vmem:[%s271 + $0x8] sm:$0xff] %v475
        %s478 = sand.u32 %s141, 1
        %s479 = scalar_lea.sflag [#allocation4], %s478
        %s480 = sand.u32 %s141, 1
        %s481 = smul.addr %s480, 16
        %s482 = scalar_lea.vmem [#allocation8], %s481
        // Predicated region
        $region53: #{tpu_custom_call.1} parent=39 // pred_check
          %p483 = pneg %p151
        $region54: #{tpu_custom_call.1} parent=39 // pred_check_branch
          %485 = sbr.rel (%p483) target = $region56
        $region55: #{tpu_custom_call.1} parent=39 // pred_region
          %s486 = smul.u32 2, %s23
          %s488 = ssub.s32 256, 256
          %489 = vsyncadd %s479, %s488
          %s490 = smul.addr %s486, 128
          %s491 = scalar_lea.hbm %s5, %s490
          %s492 = sshll.u32 %s482, 4
          %s493 = int_to_ptr.vmem [resolvable:$true] %s492
          %498 = dma.vmem_to_hbm [thread:$0]  %s493, 256, %s491, %s479, 128, 128, 8
        $region56: #{tpu_custom_call.1} parent=39 // pred_fallthru
          _
      $region40: #{tpu_custom_call.1} parent=5 // pred_fallthru
        _
      %p499 = scmp.le.s32.totalorder 2, %s18
      // Predicated region
      $region57: #{tpu_custom_call.1} parent=5 // pred_check
        %p500 = pneg %p499
      $region58: #{tpu_custom_call.1} parent=5 // pred_check_branch
        %502 = sbr.rel (%p500) target = $region60
      $region59: #{tpu_custom_call.1} parent=5 // pred_region
        %s503 = ssub.s32 %s18, 2
        // Predicated region
        $region61: #{tpu_custom_call.1} parent=59 // pred_check
          %p504 = pneg %p157
        $region62: #{tpu_custom_call.1} parent=59 // pred_check_branch
          %506 = sbr.rel (%p504) target = $region64
        $region63: #{tpu_custom_call.1} parent=59 // pred_region
          %s507 = sand.u32 %s142, 1
          %s508 = scalar_lea.sflag [#allocation4], %s507
          %s509 = sand.u32 %s142, 1
          %s510 = smul.addr %s509, 16
          %s511 = scalar_lea.vmem [#allocation8], %s510
          %512 = dma.done %s508, 256
        $region64: #{tpu_custom_call.1} parent=59 // pred_fallthru
          _
      $region60: #{tpu_custom_call.1} parent=5 // pred_fallthru
        _
    $region6: #{tpu_custom_call.1} parent=1 // loop_footer
      %s22 = sadd.s32 1, %s18
    $region7: #{tpu_custom_call.1} parent=1 // loop_footer_branch
      %17 = sbr.rel target = $region3
    $region8: #{tpu_custom_call.1} parent=1 // loop_exit
      _
    %513 = vsyncpa [#allocation3], 1
    %s514 = scalar_lea.sflag [#allocation3], 1
    %515 = vsyncpa %s514, 1
    %516 = vsyncpa [#allocation6], 1
    %517 = vsyncpa [#allocation4], 1
    %s518 = scalar_lea.sflag [#allocation4], 1
    %519 = vsyncpa %s518, 1

// kernel: tpu_custom_call.1
$region0: #{tpu_custom_call.1}
  #allocation0 [shape = 'u32[]', space=smem, size = 0x4, offset = 0x4, fixed_abs, tag = 'smem constant byte address 0x4 - core index']
  #allocation1 [shape = 'u32[144,128]{1,0:T(1,128)}', space=vmem, size = 0x12000, scoped, tag = 'internal scratch']
  %s0 = inlined_call_operand.hbm [shape: f32[32,128], index: 0, kind: input, shape index: {}]
  %s1 = inlined_call_operand.hbm [shape: f32[128,128], index: 1, kind: input, shape index: {}]
  %s2 = inlined_call_operand.vmem [shape: f32[1,128], index: 2, kind: input, shape index: {}]
  %s3 = inlined_call_operand.hbm [shape: f32[128,128], index: 3, kind: input, shape index: {}]
  %s4 = inlined_call_operand.vmem [shape: f32[1,128], index: 4, kind: input, shape index: {}]
  %s5 = inlined_call_operand.hbm [shape: f32[32,128], index: 5, kind: output, shape index: {}]
  %s6 = sld [smem:[#allocation0]]
  $region65: #{tpu_custom_call.1} parent=0
    _
  %s8 = ssub.s32 1, %s6
  %s9 = scalar_select 0, %s8, %s6
  $region1: #{tpu_custom_call.1} parent=0
    #allocation2 [shape = 'u8[16384]{0}', space=vmem, size = 0x4000, scoped, tag = 'input window, operand 0']
    #allocation3 [shape = 's32[2]{0}', space=sflag, size = 0x8, scoped, tag = 'scoped memory for tpu_custom_call.1']
    #allocation4 [shape = 's32[2]{0}', space=sflag, size = 0x8, scoped, tag = 'scoped memory for tpu_custom_call.1']
    #allocation5 [shape = 'u8[65536]{0}', space=vmem, size = 0x10000, scoped, tag = 'input window, operand 1, single buffered']
    #allocation6 [shape = 's32[1]{0}', space=sflag, size = 0x4, scoped, tag = 'scoped memory for tpu_custom_call.1']
    #allocation7 [shape = 'u8[65536]{0}', space=vmem, size = 0x10000, scoped, tag = 'input window, operand 3, single buffered']
    #allocation8 [shape = 'u8[16384]{0}', space=vmem, size = 0x4000, scoped, tag = 'output window, operand 0']
    %10 = vsyncpa [#allocation3], 0
    %s11 = scalar_lea.sflag [#allocation3], 1
    %12 = vsyncpa %s11, 0
    %13 = vsyncpa [#allocation6], 0
    %14 = vsyncpa [#allocation4], 0
    %s15 = scalar_lea.sflag [#allocation4], 1
    %16 = vsyncpa %s15, 0
    loop: start=0, step=1, limit=4
    $region2: #{tpu_custom_call.1} parent=1 // loop_pre_header
      _
    $region3: #{tpu_custom_call.1} parent=1 // loop_header
      %s18 = sphi 0, %s22
      %p19 = scmp.ge.s32.totalorder %s18, 4
      %s28 = sphi 0, %s30
      %s31 = sphi 0, %s28
      %s32 = sphi 0, %s31
      %s48 = sphi 0, %s32
      %s52 = sphi 0, %s52
      %s54 = sphi 0, %s52
      %s55 = sphi 0, %s54
      %s69 = sphi 0, %s55
      %s73 = sphi 0, %s73
      %s75 = sphi 0, %s73
      %s76 = sphi 0, %s75
      %s90 = sphi 0, %s76
      %s94 = sphi 0, %s94
      %s96 = sphi 0, %s94
      %s97 = sphi 0, %s96
      %s111 = sphi 0, %s97
      %s115 = sphi 0, %s115
      %s117 = sphi 0, %s115
      %s118 = sphi 0, %s117
      %s132 = sphi 0, %s118
      %s138 = sphi 0, %s140
      %s141 = sphi 0, %s138
      %s142 = sphi 0, %s141
      %s158 = sphi 0, %s142
    $region4: #{tpu_custom_call.1} parent=1 // loop_header_branch
      %21 = sbr.rel (%p19) target = $region8
    $region5: #{tpu_custom_call.1} parent=1 // loop_body
      %s23 = ssub.s32 %s18, 1
      %s24 = ssub.s32 %s18, 2
      %s25 = sadd.s32 %s18, 1
      %s26 = ssub.s32 %s18, %s25
      %p27 = scmp.eq.s32.totalorder %s26, 0
      %s29 = sadd.s32 %s28, 1
      %s30 = scalar_select %p27, %s28, %s29
      %p33 = pneg %p27
      %p34 = scmp.eq.s32.totalorder %s18, 1
      %p35 = por %p33, %p34
      %p36 = scmp.ne.s32.totalorder %s28, %s31
      %p37 = scmp.eq.s32.totalorder %s18, 0
      %p38 = por %p36, %p37
      %p39 = scmp.ne.s32.totalorder %s28, %s31
      %p40 = scmp.eq.s32.totalorder %s23, 1
      %p41 = por %p39, %p40
      %p42 = scmp.ne.s32.totalorder %s31, %s32
      %p43 = scmp.eq.s32.totalorder %s23, 0
      %p44 = por %p42, %p43
      %p45 = scmp.ne.s32.totalorder %s31, %s32
      %p46 = scmp.eq.s32.totalorder %s24, 1
      %p47 = por %p45, %p46
      %p49 = scmp.ne.s32.totalorder %s32, %s48
      %p50 = scmp.eq.s32.totalorder %s24, 0
      %p51 = por %p49, %p50
      %s53 = sadd.s32 %s52, 1
      %p56 = scmp.eq.s32.totalorder %s18, 1
      %p57 = scmp.ne.s32.totalorder %s52, %s54
      %p58 = scmp.eq.s32.totalorder %s18, 0
      %p59 = por %p57, %p58
      %p60 = scmp.ne.s32.totalorder %s52, %s54
      %p61 = scmp.eq.s32.totalorder %s23, 1
      %p62 = por %p60, %p61
      %p63 = scmp.ne.s32.totalorder %s54, %s55
      %p64 = scmp.eq.s32.totalorder %s23, 0
      %p65 = por %p63, %p64
      %p66 = scmp.ne.s32.totalorder %s54, %s55
      %p67 = scmp.eq.s32.totalorder %s24, 1
      %p68 = por %p66, %p67
      %p70 = scmp.ne.s32.totalorder %s55, %s69
      %p71 = scmp.eq.s32.totalorder %s24, 0
      %p72 = por %p70, %p71
      %s74 = sadd.s32 %s73, 1
      %p77 = scmp.eq.s32.totalorder %s18, 1
      %p78 = scmp.ne.s32.totalorder %s73, %s75
      %p79 = scmp.eq.s32.totalorder %s18, 0
      %p80 = por %p78, %p79
      %p81 = scmp.ne.s32.totalorder %s73, %s75
      %p82 = scmp.eq.s32.totalorder %s23, 1
      %p83 = por %p81, %p82
      %p84 = scmp.ne.s32.totalorder %s75, %s76
      %p85 = scmp.eq.s32.totalorder %s23, 0
      %p86 = por %p84, %p85
      %p87 = scmp.ne.s32.totalorder %s75, %s76
      %p88 = scmp.eq.s32.totalorder %s24, 1
      %p89 = por %p87, %p88
      %p91 = scmp.ne.s32.totalorder %s76, %s90
      %p92 = scmp.eq.s32.totalorder %s24, 0
      %p93 = por %p91, %p92
      %s95 = sadd.s32 %s94, 1
      %p98 = scmp.eq.s32.totalorder %s18, 1
      %p99 = scmp.ne.s32.totalorder %s94, %s96
      %p100 = scmp.eq.s32.totalorder %s18, 0
      %p101 = por %p99, %p100
      %p102 = scmp.ne.s32.totalorder %s94, %s96
      %p103 = scmp.eq.s32.totalorder %s23, 1
      %p104 = por %p102, %p103
      %p105 = scmp.ne.s32.totalorder %s96, %s97
      %p106 = scmp.eq.s32.totalorder %s23, 0
      %p107 = por %p105, %p106
      %p108 = scmp.ne.s32.totalorder %s96, %s97
      %p109 = scmp.eq.s32.totalorder %s24, 1
      %p110 = por %p108, %p109
      %p112 = scmp.ne.s32.totalorder %s97, %s111
      %p113 = scmp.eq.s32.totalorder %s24, 0
      %p114 = por %p112, %p113
      %s116 = sadd.s32 %s115, 1
      %p119 = scmp.eq.s32.totalorder %s18, 1
      %p120 = scmp.ne.s32.totalorder %s115, %s117
      %p121 = scmp.eq.s32.totalorder %s18, 0
      %p122 = por %p120, %p121
      %p123 = scmp.ne.s32.totalorder %s115, %s117
      %p124 = scmp.eq.s32.totalorder %s23, 1
      %p125 = por %p123, %p124
      %p126 = scmp.ne.s32.totalorder %s117, %s118
      %p127 = scmp.eq.s32.totalorder %s23, 0
      %p128 = por %p126, %p127
      %p129 = scmp.ne.s32.totalorder %s117, %s118
      %p130 = scmp.eq.s32.totalorder %s24, 1
      %p131 = por %p129, %p130
      %p133 = scmp.ne.s32.totalorder %s118, %s132
      %p134 = scmp.eq.s32.totalorder %s24, 0
      %p135 = por %p133, %p134
      %s136 = ssub.s32 %s18, %s25
      %p137 = scmp.eq.s32.totalorder %s136, 0
      %s139 = sadd.s32 %s138, 1
      %s140 = scalar_select %p137, %s138, %s139
      %p143 = pneg %p137
      %p144 = scmp.eq.s32.totalorder %s18, 1
      %p145 = por %p143, %p144
      %p146 = scmp.ne.s32.totalorder %s138, %s141
      %p147 = scmp.eq.s32.totalorder %s18, 0
      %p148 = por %p146, %p147
      %p149 = scmp.ne.s32.totalorder %s138, %s141
      %p150 = scmp.eq.s32.totalorder %s23, 1
      %p151 = por %p149, %p150
      %p152 = scmp.ne.s32.totalorder %s141, %s142
      %p153 = scmp.eq.s32.totalorder %s23, 0
      %p154 = por %p152, %p153
      %p155 = scmp.ne.s32.totalorder %s141, %s142
      %p156 = scmp.eq.s32.totalorder %s24, 1
      %p157 = por %p155, %p156
      %p159 = scmp.ne.s32.totalorder %s142, %s158
      %p160 = scmp.eq.s32.totalorder %s24, 0
      %p161 = por %p159, %p160
      %p162 = scmp.le.s32.totalorder 1, %s18
      %p163 = scmp.lt.s32.totalorder %s18, 3
      %p164 = pnand %p162, %p163
      %p165 = pneg %p164
      // Predicated region
      $region9: #{tpu_custom_call.1} parent=5 // pred_check
        _
      $region10: #{tpu_custom_call.1} parent=5 // pred_check_branch
        %167 = sbr.rel (%p164) target = $region12
      $region11: #{tpu_custom_call.1} parent=5 // pred_region
        %s168 = ssub.s32 %s18, 1
        // Predicated region
        $region13: #{tpu_custom_call.1} parent=11 // pred_check
          %p169 = pneg %p65
        $region14: #{tpu_custom_call.1} parent=11 // pred_check_branch
          %171 = sbr.rel (%p169) target = $region16
        $region15: #{tpu_custom_call.1} parent=11 // pred_region
          %s173 = ssub.s32 2048, 2048
          %174 = vsyncadd [#allocation6], %s173
          %s175 = sshll.u32 [#allocation5], 4
          %s176 = int_to_ptr.vmem [resolvable:$true] %s175
          %181 = dma.hbm_to_vmem [thread:$0]  %s1, 2048, %s176, [#allocation6], 128, 128, 8
        $region16: #{tpu_custom_call.1} parent=11 // pred_fallthru
          _
        // Predicated region
        $region17: #{tpu_custom_call.1} parent=11 // pred_check
          %p182 = pneg %p86
        $region18: #{tpu_custom_call.1} parent=11 // pred_check_branch
          %184 = sbr.rel (%p182) target = $region20
        $region19: #{tpu_custom_call.1} parent=11 // pred_region
          _
        $region20: #{tpu_custom_call.1} parent=11 // pred_fallthru
          _
        // Predicated region
        $region21: #{tpu_custom_call.1} parent=11 // pred_check
          %p185 = pneg %p107
        $region22: #{tpu_custom_call.1} parent=11 // pred_check_branch
          %187 = sbr.rel (%p185) target = $region24
        $region23: #{tpu_custom_call.1} parent=11 // pred_region
          %s189 = ssub.s32 2048, 2048
          %190 = vsyncadd [#allocation6], %s189
          %s191 = sshll.u32 [#allocation7], 4
          %s192 = int_to_ptr.vmem [resolvable:$true] %s191
          %197 = dma.hbm_to_vmem [thread:$0]  %s3, 2048, %s192, [#allocation6], 128, 128, 8
        $region24: #{tpu_custom_call.1} parent=11 // pred_fallthru
          _
        // Predicated region
        $region25: #{tpu_custom_call.1} parent=11 // pred_check
          %p198 = pneg %p128
        $region26: #{tpu_custom_call.1} parent=11 // pred_check_branch
          %200 = sbr.rel (%p198) target = $region28
        $region27: #{tpu_custom_call.1} parent=11 // pred_region
          _
        $region28: #{tpu_custom_call.1} parent=11 // pred_fallthru
          _
      $region12: #{tpu_custom_call.1} parent=5 // pred_fallthru
        _
      %p201 = scmp.lt.s32.totalorder %s18, 2
      // Predicated region
      $region29: #{tpu_custom_call.1} parent=5 // pred_check
        %p202 = pneg %p201
      $region30: #{tpu_custom_call.1} parent=5 // pred_check_branch
        %204 = sbr.rel (%p202) target = $region32
      $region31: #{tpu_custom_call.1} parent=5 // pred_region
        // Predicated region
        $region33: #{tpu_custom_call.1} parent=31 // pred_check
          %p205 = pneg %p38
        $region34: #{tpu_custom_call.1} parent=31 // pred_check_branch
          %207 = sbr.rel (%p205) target = $region36
        $region35: #{tpu_custom_call.1} parent=31 // pred_region
          %s208 = sand.u32 %s28, 1
          %s209 = scalar_lea.sflag [#allocation3], %s208
          %s210 = sand.u32 %s28, 1
          %s211 = smul.addr %s210, 16
          %s212 = scalar_lea.vmem [#allocation2], %s211
          %s213 = smul.u32 2, %s18
          %s215 = ssub.s32 256, 256
          %216 = vsyncadd %s209, %s215
          %s217 = smul.addr %s213, 128
          %s218 = scalar_lea.hbm %s0, %s217
          %s219 = sshll.u32 %s212, 4
          %s220 = int_to_ptr.vmem [resolvable:$true] %s219
          %225 = dma.hbm_to_vmem [thread:$0]  %s218, 256, %s220, %s209, 128, 128, 8
        $region36: #{tpu_custom_call.1} parent=31 // pred_fallthru
          _
      $region32: #{tpu_custom_call.1} parent=5 // pred_fallthru
        _
      %p226 = scmp.le.s32.totalorder 1, %s18
      %p227 = scmp.lt.s32.totalorder %s18, 3
      %p228 = pnand %p226, %p227
      %p229 = pneg %p228
      // Predicated region
      $region37: #{tpu_custom_call.1} parent=5 // pred_check
        _
      $region38: #{tpu_custom_call.1} parent=5 // pred_check_branch
        %231 = sbr.rel (%p228) target = $region40
      $region39: #{tpu_custom_call.1} parent=5 // pred_region
        %s232 = ssub.s32 %s18, 1
        %s233 = sand.u32 %s31, 1
        %s234 = scalar_lea.sflag [#allocation3], %s233
        %s235 = sand.u32 %s31, 1
        %s236 = smul.addr %s235, 16
        %s237 = scalar_lea.vmem [#allocation2], %s236
        // Predicated region
        $region41: #{tpu_custom_call.1} parent=39 // pred_check
          %p238 = pneg %p44
        $region42: #{tpu_custom_call.1} parent=39 // pred_check_branch
          %240 = sbr.rel (%p238) target = $region44
        $region43: #{tpu_custom_call.1} parent=39 // pred_region
          %241 = dma.done %s234, 256
        $region44: #{tpu_custom_call.1} parent=39 // pred_fallthru
          _
        // Predicated region
        $region45: #{tpu_custom_call.1} parent=39 // pred_check
          %p242 = pneg %p65
        $region46: #{tpu_custom_call.1} parent=39 // pred_check_branch
          %244 = sbr.rel (%p242) target = $region48
        $region47: #{tpu_custom_call.1} parent=39 // pred_region
          %245 = dma.done [#allocation6], 2048
        $region48: #{tpu_custom_call.1} parent=39 // pred_fallthru
          _
        // Predicated region
        $region49: #{tpu_custom_call.1} parent=39 // pred_check
          %p246 = pneg %p107
        $region50: #{tpu_custom_call.1} parent=39 // pred_check_branch
          %248 = sbr.rel (%p246) target = $region52
        $region51: #{tpu_custom_call.1} parent=39 // pred_region
          %249 = dma.done [#allocation6], 2048
        $region52: #{tpu_custom_call.1} parent=39 // pred_fallthru
          _
        %s250 = sand.u32 %s31, 1
        %s251 = scalar_lea.sflag [#allocation3], %s250
        %s252 = sand.u32 %s31, 1
        %s253 = smul.addr %s252, 16
        %s254 = scalar_lea.vmem [#allocation2], %s253
        %p255 = pneg %p44
        %p256 = pneg %p41
        %p257 = pneg %p65
        %p258 = pneg %p62
        %p259 = pneg %p86
        %p260 = pneg %p83
        %p261 = pneg %p107
        %p262 = pneg %p104
        %p263 = pneg %p128
        %p264 = pneg %p125
        %p265 = pneg %p154
        %p266 = pneg %p151
        %s267 = sand.u32 %s141, 1
        %s268 = scalar_lea.sflag [#allocation4], %s267
        %s269 = sand.u32 %s141, 1
        %s270 = smul.addr %s269, 16
        %s271 = scalar_lea.vmem [#allocation8], %s270
        %s272 = smul.u32 2, %s23
        %s273 = smul.u32 2, %s23
        %v274 = vld [vmem:[%s237] sm:$0xff]
        %v275 = vld [vmem:[%s237 + $0x8] sm:$0xff]
        %v276 = vld [vmem:[#allocation5] sm:$0xff]
        %v277 = vld [vmem:[#allocation5 + $0x8] sm:$0xff]
        %v278 = vld [vmem:[#allocation5 + $0x10] sm:$0xff]
        %v279 = vld [vmem:[#allocation5 + $0x18] sm:$0xff]
        %v280 = vld [vmem:[#allocation5 + $0x20] sm:$0xff]
        %v281 = vld [vmem:[#allocation5 + $0x28] sm:$0xff]
        %v282 = vld [vmem:[#allocation5 + $0x30] sm:$0xff]
        %v283 = vld [vmem:[#allocation5 + $0x38] sm:$0xff]
        %v284 = vld [vmem:[#allocation5 + $0x40] sm:$0xff]
        %v285 = vld [vmem:[#allocation5 + $0x48] sm:$0xff]
        %v286 = vld [vmem:[#allocation5 + $0x50] sm:$0xff]
        %v287 = vld [vmem:[#allocation5 + $0x58] sm:$0xff]
        %v288 = vld [vmem:[#allocation5 + $0x60] sm:$0xff]
        %v289 = vld [vmem:[#allocation5 + $0x68] sm:$0xff]
        %v290 = vld [vmem:[#allocation5 + $0x70] sm:$0xff]
        %v291 = vld [vmem:[#allocation5 + $0x78] sm:$0xff]
        %v292 = vld [vmem:[%s2] sm:$0x1]
        %v294 = vlaneseq
        %v295 = vshrl.u32 %v294, 7
        %v296 = vsub.s32 0, %v295
        %v297 = vrot.slane %v292, %v296
        %299 = vmatprep.subr.mxu0 0.0
        %300 = vmatpush1.msra.mxu0 %v276
        %301 = vmatprep.subr.mxu0 0.0
        %302 = vmatpush1.msra.mxu0 %v277
        %303 = vmatprep.subr.mxu0 0.0
        %304 = vmatpush1.msra.mxu0 %v278
        %305 = vmatprep.subr.mxu0 0.0
        %306 = vmatpush1.msra.mxu0 %v279
        %307 = vmatprep.subr.mxu0 0.0
        %308 = vmatpush1.msra.mxu0 %v280
        %309 = vmatprep.subr.mxu0 0.0
        %310 = vmatpush1.msra.mxu0 %v281
        %311 = vmatprep.subr.mxu0 0.0
        %312 = vmatpush1.msra.mxu0 %v282
        %313 = vmatprep.subr.mxu0 0.0
        %314 = vmatpush1.msra.mxu0 %v283
        %315 = vmatprep.subr.mxu0 0.0
        %316 = vmatpush1.msra.mxu0 %v284
        %317 = vmatprep.subr.mxu0 0.0
        %318 = vmatpush1.msra.mxu0 %v285
        %319 = vmatprep.subr.mxu0 0.0
        %320 = vmatpush1.msra.mxu0 %v286
        %321 = vmatprep.subr.mxu0 0.0
        %322 = vmatpush1.msra.mxu0 %v287
        %323 = vmatprep.subr.mxu0 0.0
        %324 = vmatpush1.msra.mxu0 %v288
        %325 = vmatprep.subr.mxu0 0.0
        %326 = vmatpush1.msra.mxu0 %v289
        %327 = vmatprep.subr.mxu0 0.0
        %328 = vmatpush1.msra.mxu0 %v290
        %329 = vmatprep.subr.mxu0 0.0
        %330 = vmatpush1.msra.mxu0 %v291
        %331 = vmatprep.subr.mxu0 0.0
        %332 = vmatpush1.msra.mxu0 0.0
        %333 = vmatprep.subr.mxu0 0.0
        %334 = vmatpush1.msra.mxu0 0.0
        %335 = vmatprep.subr.mxu0 0.0
        %336 = vmatpush1.msra.mxu0 0.0
        %337 = vmatprep.subr.mxu0 0.0
        %338 = vmatpush1.msra.mxu0 0.0
        %339 = vmatprep.subr.mxu0 0.0
        %340 = vmatpush1.msra.mxu0 0.0
        %341 = vmatprep.subr.mxu0 0.0
        %342 = vmatpush1.msra.mxu0 0.0
        %343 = vmatprep.subr.mxu0 0.0
        %344 = vmatpush1.msra.mxu0 0.0
        %345 = vmatprep.subr.mxu0 0.0
        %346 = vmatpush1.msra.mxu0 0.0
        %347 = vmatprep.subr.mxu0 0.0
        %348 = vmatpush1.msra.mxu0 0.0
        %349 = vmatprep.subr.mxu0 0.0
        %350 = vmatpush1.msra.mxu0 0.0
        %351 = vmatprep.subr.mxu0 0.0
        %352 = vmatpush1.msra.mxu0 0.0
        %353 = vmatprep.subr.mxu0 0.0
        %354 = vmatpush1.msra.mxu0 0.0
        %355 = vmatprep.subr.mxu0 0.0
        %356 = vmatpush1.msra.mxu0 0.0
        %357 = vmatprep.subr.mxu0 0.0
        %358 = vmatpush1.msra.mxu0 0.0
        %359 = vmatprep.subr.mxu0 0.0
        %360 = vmatpush1.msra.mxu0 0.0
        %361 = vmatprep.subr.mxu0 0.0
        %362 = vmatpush1.msra.mxu0 0.0
        %363 = vmatprep.mubr.f32.mxu0 0.0
        %364 = vmatmul.mubr.f32.gmra.mrb[0].mxu0 %v274
        %v365 = vpop.f32.mrb[0].mxu0
        %v366 = vadd.f32 %v297, %v365
        %v367 = vpop.f32.mrb[0].mxu0
        %368 = vmatprep.mubr.f32.mxu0 0.0
        %369 = vmatmul.mubr.f32.gmra.mrb[0].mxu0 %v275
        %v370 = vpop.f32.mrb[0].mxu0
        %v371 = vadd.f32 %v297, %v370
        %v372 = vpop.f32.mrb[0].mxu0
        %373 = vdwg.mxu0
        %v374 = vmax.f32 %v366, 0.0
        %v375 = vmax.f32 %v371, 0.0
        %v376 = vld [vmem:[#allocation7] sm:$0xff]
        %v377 = vld [vmem:[#allocation7 + $0x8] sm:$0xff]
        %v378 = vld [vmem:[#allocation7 + $0x10] sm:$0xff]
        %v379 = vld [vmem:[#allocation7 + $0x18] sm:$0xff]
        %v380 = vld [vmem:[#allocation7 + $0x20] sm:$0xff]
        %v381 = vld [vmem:[#allocation7 + $0x28] sm:$0xff]
        %v382 = vld [vmem:[#allocation7 + $0x30] sm:$0xff]
        %v383 = vld [vmem:[#allocation7 + $0x38] sm:$0xff]
        %v384 = vld [vmem:[#allocation7 + $0x40] sm:$0xff]
        %v385 = vld [vmem:[#allocation7 + $0x48] sm:$0xff]
        %v386 = vld [vmem:[#allocation7 + $0x50] sm:$0xff]
        %v387 = vld [vmem:[#allocation7 + $0x58] sm:$0xff]
        %v388 = vld [vmem:[#allocation7 + $0x60] sm:$0xff]
        %v389 = vld [vmem:[#allocation7 + $0x68] sm:$0xff]
        %v390 = vld [vmem:[#allocation7 + $0x70] sm:$0xff]
        %v391 = vld [vmem:[#allocation7 + $0x78] sm:$0xff]
        %v392 = vld [vmem:[%s4] sm:$0x1]
        %v394 = vlaneseq
        %v395 = vshrl.u32 %v394, 7
        %v396 = vsub.s32 0, %v395
        %v397 = vrot.slane %v392, %v396
        %399 = vmatprep.subr.mxu0 0.0
        %400 = vmatpush1.msra.mxu0 %v376
        %401 = vmatprep.subr.mxu0 0.0
        %402 = vmatpush1.msra.mxu0 %v377
        %403 = vmatprep.subr.mxu0 0.0
        %404 = vmatpush1.msra.mxu0 %v378
        %405 = vmatprep.subr.mxu0 0.0
        %406 = vmatpush1.msra.mxu0 %v379
        %407 = vmatprep.subr.mxu0 0.0
        %408 = vmatpush1.msra.mxu0 %v380
        %409 = vmatprep.subr.mxu0 0.0
        %410 = vmatpush1.msra.mxu0 %v381
        %411 = vmatprep.subr.mxu0 0.0
        %412 = vmatpush1.msra.mxu0 %v382
        %413 = vmatprep.subr.mxu0 0.0
        %414 = vmatpush1.msra.mxu0 %v383
        %415 = vmatprep.subr.mxu0 0.0
        %416 = vmatpush1.msra.mxu0 %v384
        %417 = vmatprep.subr.mxu0 0.0
        %418 = vmatpush1.msra.mxu0 %v385
        %419 = vmatprep.subr.mxu0 0.0
        %420 = vmatpush1.msra.mxu0 %v386
        %421 = vmatprep.subr.mxu0 0.0
        %422 = vmatpush1.msra.mxu0 %v387
        %423 = vmatprep.subr.mxu0 0.0
        %424 = vmatpush1.msra.mxu0 %v388
        %425 = vmatprep.subr.mxu0 0.0
        %426 = vmatpush1.msra.mxu0 %v389
        %427 = vmatprep.subr.mxu0 0.0
        %428 = vmatpush1.msra.mxu0 %v390
        %429 = vmatprep.subr.mxu0 0.0
        %430 = vmatpush1.msra.mxu0 %v391
        %431 = vmatprep.subr.mxu0 0.0
        %432 = vmatpush1.msra.mxu0 0.0
        %433 = vmatprep.subr.mxu0 0.0
        %434 = vmatpush1.msra.mxu0 0.0
        %435 = vmatprep.subr.mxu0 0.0
        %436 = vmatpush1.msra.mxu0 0.0
        %437 = vmatprep.subr.mxu0 0.0
        %438 = vmatpush1.msra.mxu0 0.0
        %439 = vmatprep.subr.mxu0 0.0
        %440 = vmatpush1.msra.mxu0 0.0
        %441 = vmatprep.subr.mxu0 0.0
        %442 = vmatpush1.msra.mxu0 0.0
        %443 = vmatprep.subr.mxu0 0.0
        %444 = vmatpush1.msra.mxu0 0.0
        %445 = vmatprep.subr.mxu0 0.0
        %446 = vmatpush1.msra.mxu0 0.0
        %447 = vmatprep.subr.mxu0 0.0
        %448 = vmatpush1.msra.mxu0 0.0
        %449 = vmatprep.subr.mxu0 0.0
        %450 = vmatpush1.msra.mxu0 0.0
        %451 = vmatprep.subr.mxu0 0.0
        %452 = vmatpush1.msra.mxu0 0.0
        %453 = vmatprep.subr.mxu0 0.0
        %454 = vmatpush1.msra.mxu0 0.0
        %455 = vmatprep.subr.mxu0 0.0
        %456 = vmatpush1.msra.mxu0 0.0
        %457 = vmatprep.subr.mxu0 0.0
        %458 = vmatpush1.msra.mxu0 0.0
        %459 = vmatprep.subr.mxu0 0.0
        %460 = vmatpush1.msra.mxu0 0.0
        %461 = vmatprep.subr.mxu0 0.0
        %462 = vmatpush1.msra.mxu0 0.0
        %463 = vmatprep.mubr.f32.mxu0 0.0
        %464 = vmatmul.mubr.f32.gmra.mrb[0].mxu0 %v374
        %v465 = vpop.f32.mrb[0].mxu0
        %v466 = vadd.f32 %v397, %v465
        %v467 = vpop.f32.mrb[0].mxu0
        %468 = vmatprep.mubr.f32.mxu0 0.0
        %469 = vmatmul.mubr.f32.gmra.mrb[0].mxu0 %v375
        %v470 = vpop.f32.mrb[0].mxu0
        %v471 = vadd.f32 %v397, %v470
        %v472 = vpop.f32.mrb[0].mxu0
        %473 = vdwg.mxu0
        %v474 = vmax.f32 %v466, 0.0
        %v475 = vmax.f32 %v471, 0.0
        %476 = vst [vmem:[%s271] sm:$0xff] %v474
        %477 = vst [vmem:[%s271 + $0x8] sm:$0xff] %v475
        %s478 = sand.u32 %s141, 1
        %s479 = scalar_lea.sflag [#allocation4], %s478
        %s480 = sand.u32 %s141, 1
        %s481 = smul.addr %s480, 16
        %s482 = scalar_lea.vmem [#allocation8], %s481
        // Predicated region
        $region53: #{tpu_custom_call.1} parent=39 // pred_check
          %p483 = pneg %p151
        $region54: #{tpu_custom_call.1} parent=39 // pred_check_branch
          %485 = sbr.rel (%p483) target = $region56
        $region55: #{tpu_custom_call.1} parent=39 // pred_region
          %s486 = smul.u32 2, %s23
          %s488 = ssub.s32 256, 256
          %489 = vsyncadd %s479, %s488
          %s490 = smul.addr %s486, 128
          %s491 = scalar_lea.hbm %s5, %s490
          %s492 = sshll.u32 %s482, 4
          %s493 = int_to_ptr.vmem [resolvable:$true] %s492
          %498 = dma.vmem_to_hbm [thread:$0]  %s493, 256, %s491, %s479, 128, 128, 8
        $region56: #{tpu_custom_call.1} parent=39 // pred_fallthru
          _
      $region40: #{tpu_custom_call.1} parent=5 // pred_fallthru
        _
      %p499 = scmp.le.s32.totalorder 2, %s18
      // Predicated region
      $region57: #{tpu_custom_call.1} parent=5 // pred_check
        %p500 = pneg %p499
      $region58: #{tpu_custom_call.1} parent=5 // pred_check_branch
        %502 = sbr.rel (%p500) target = $region60
      $region59: #{tpu_custom_call.1} parent=5 // pred_region
        %s503 = ssub.s32 %s18, 2
        // Predicated region
        $region61: #{tpu_custom_call.1} parent=59 // pred_check
          %p504 = pneg %p157
        $region62: #{tpu_custom_call.1} parent=59 // pred_check_branch
          %506 = sbr.rel (%p504) target = $region64
        $region63: #{tpu_custom_call.1} parent=59 // pred_region
          %s507 = sand.u32 %s142, 1
          %s508 = scalar_lea.sflag [#allocation4], %s507
          %s509 = sand.u32 %s142, 1
          %s510 = smul.addr %s509, 16
          %s511 = scalar_lea.vmem [#allocation8], %s510
          %512 = dma.done %s508, 256
        $region64: #{tpu_custom_call.1} parent=59 // pred_fallthru
          _
      $region60: #{tpu_custom_call.1} parent=5 // pred_fallthru
        _
    $region6: #{tpu_custom_call.1} parent=1 // loop_footer
      %s22 = sadd.s32 1, %s18
    $region7: #{tpu_custom_call.1} parent=1 // loop_footer_branch
      %17 = sbr.rel target = $region3
    $region8: #{tpu_custom_call.1} parent=1 // loop_exit
      _
    %513 = vsyncpa [#allocation3], 1
    %s514 = scalar_lea.sflag [#allocation3], 1
    %515 = vsyncpa %s514, 1
    %516 = vsyncpa [#allocation6], 1
    %517 = vsyncpa [#allocation4], 1
    %s518 = scalar_lea.sflag [#allocation4], 1
    %519 = vsyncpa %s518, 1

</llo_original>
